<compile_context>
chip_gen: v7x
topology: tpu7x:2x2x1
jax: 0.10.0
libtpu: 0.0.40
codegen_flags: <defaults>
</compile_context>

<pallas_src>
import functools

import jax
import jax.numpy as jnp
from jax.experimental import pallas as pl
from jax.experimental.pallas import tpu as pltpu


def _round_up(x, m):
    return ((x + m - 1) // m) * m


def _policy_mlp_kernel(x_ref, w1_ref, b1_ref, w2_ref, b2_ref,
                       w3_ref, b3_ref, mean_ref):
    # Three lane-dense MXU matmuls with f32 accumulation; bias adds on the VPU
    # and tanh on the EUP. Everything stays resident in VMEM for the step.
    x = x_ref[...]
    h1 = jnp.tanh(
        jnp.dot(x, w1_ref[...], preferred_element_type=jnp.float32)
        + b1_ref[...].astype(jnp.float32))
    h2 = jnp.tanh(
        jnp.dot(h1.astype(w2_ref.dtype), w2_ref[...],
                preferred_element_type=jnp.float32)
        + b2_ref[...].astype(jnp.float32))
    mean = (jnp.dot(h2.astype(w3_ref.dtype), w3_ref[...],
                    preferred_element_type=jnp.float32)
            + b3_ref[...].astype(jnp.float32))
    mean_ref[...] = mean.astype(mean_ref.dtype)


@functools.partial(jax.jit, static_argnames=("max_block_b", "compute_dtype"))
def trpo_forward(obs, params, *, max_block_b=512, compute_dtype=jnp.float32):
    """Returns (mean, std) of the Gaussian policy distribution for `obs`.

    obs: (B, obs_dim) float32
    params: dict with w1,b1,w2,b2,w3,b3,log_std (unpadded shapes)
    compute_dtype: jnp.float32 (default, required on v5e) or jnp.bfloat16
                   (recommended for the matmul inputs on v6e/v7x).
    """
    B, obs_dim = obs.shape
    hidden = params["w1"].shape[1]
    ac_dim = params["w3"].shape[1]

    LANE, SUB = 128, 8
    obs_dim_p = _round_up(obs_dim, LANE)
    hidden_p = _round_up(hidden, LANE)
    ac_dim_p = _round_up(ac_dim, LANE)

    # Batch tile: one big tile for small rollouts, 512-row tiles otherwise.
    if B <= max_block_b:
        block_b = _round_up(B, SUB)
    else:
        block_b = max_block_b
    B_pad = _round_up(B, block_b)
    n_blocks = B_pad // block_b

    def pad2(a, rows, cols, dtype):
        a = a.astype(dtype)
        return jnp.pad(a, ((0, rows - a.shape[0]), (0, cols - a.shape[1])))

    # Zero-padding is math-preserving: padded lanes stay exactly 0 through
    # tanh(0)=0 and contribute 0 to every subsequent contraction.
    obs_p = pad2(obs, B_pad, obs_dim_p, compute_dtype)
    w1 = pad2(params["w1"], obs_dim_p, hidden_p, compute_dtype)
    b1 = pad2(params["b1"], 1, hidden_p, jnp.float32)
    w2 = pad2(params["w2"], hidden_p, hidden_p, compute_dtype)
    b2 = pad2(params["b2"], 1, hidden_p, jnp.float32)
    w3 = pad2(params["w3"], hidden_p, ac_dim_p, compute_dtype)
    b3 = pad2(params["b3"], 1, ac_dim_p, jnp.float32)

    # Weights/biases are small: full tensor at every grid step (same block
    # index each step -> the pipeliner reuses the resident copy).
    def rep(shape):
        return pl.BlockSpec(shape, lambda i: (0,) * len(shape))

    in_specs = [
        pl.BlockSpec((block_b, obs_dim_p), lambda i: (i, 0)),  # obs (batch tiled)
        rep((obs_dim_p, hidden_p)),                            # w1
        rep((1, hidden_p)),                                    # b1
        rep((hidden_p, hidden_p)),                             # w2
        rep((1, hidden_p)),                                    # b2
        rep((hidden_p, ac_dim_p)),                             # w3
        rep((1, ac_dim_p)),                                    # b3
    ]
    out_specs = pl.BlockSpec((block_b, ac_dim_p), lambda i: (i, 0))  # lane-dense

    in_bytes = jnp.dtype(compute_dtype).itemsize
    weight_elems = (obs_dim_p * hidden_p + hidden_p * hidden_p
                    + hidden_p * ac_dim_p + 2 * hidden_p + ac_dim_p)
    cost = pl.CostEstimate(
        flops=2 * B_pad * (obs_dim_p * hidden_p + hidden_p * hidden_p
                           + hidden_p * ac_dim_p),
        transcendentals=2 * B_pad * hidden_p,
        bytes_accessed=(B_pad * obs_dim_p * in_bytes
                        + weight_elems * in_bytes
                        + B_pad * ac_dim_p * 4),
    )

    mean_p = pl.pallas_call(
        _policy_mlp_kernel,
        grid=(n_blocks,),
        in_specs=in_specs,
        out_specs=out_specs,
        out_shape=jax.ShapeDtypeStruct((B_pad, ac_dim_p), jnp.float32),
        compiler_params=pltpu.CompilerParams(
            dimension_semantics=("parallel",),
            vmem_limit_bytes=64 * 1024 * 1024),
        cost_estimate=cost,
    )(obs_p, w1, b1, w2, b2, w3, b3)

    mean = mean_p[:B, :ac_dim]
    # std is state-independent: one exp + broadcast in the wrapper, no kernel
    # traffic and no per-step redundant HBM writeback.
    std = jnp.broadcast_to(jnp.exp(params["log_std"].astype(jnp.float32)),
                           (B, ac_dim))
    return mean, std


def _reference_forward(obs, params):
    h1 = jnp.tanh(obs @ params["w1"] + params["b1"])
    h2 = jnp.tanh(h1 @ params["w2"] + params["b2"])
    mean = h2 @ params["w3"] + params["b3"]
    std = jnp.broadcast_to(jnp.exp(params["log_std"]), mean.shape)
    return mean, std


def _init_params(key, obs_dim, hidden, ac_dim):
    k1, k2, k3, _ = jax.random.split(key, 4)
    scale = 0.1
    return {
        "w1": scale * jax.random.normal(k1, (obs_dim, hidden), jnp.float32),
        "b1": jnp.zeros((1, hidden), jnp.float32),
        "w2": scale * jax.random.normal(k2, (hidden, hidden), jnp.float32),
        "b2": jnp.zeros((1, hidden), jnp.float32),
        "w3": scale * jax.random.normal(k3, (hidden, ac_dim), jnp.float32),
        "b3": jnp.zeros((1, ac_dim), jnp.float32),
        "log_std": -0.5 * jnp.ones((1, ac_dim), jnp.float32),
    }


if __name__ == "__main__":
    # TODO(synk): TRPO.update (conjugate gradient / Fisher-vector products /
    # line search) relies on torch.autograd higher-order grads and in-place
    # parameter rewrites; only the forward policy-distribution pass is kernelized.
    key = jax.random.PRNGKey(0)
    k_obs, k_par = jax.random.split(key)

    B, obs_dim, hidden, ac_dim = 16, 16, 32, 4
    obs = jax.random.normal(k_obs, (B, obs_dim), jnp.float32)
    params = _init_params(k_par, obs_dim, hidden, ac_dim)

    mean, std = trpo_forward(obs, params)
    mean, std = jax.block_until_ready((mean, std))

    ref_mean, ref_std = _reference_forward(obs, params)
    assert mean.shape == (B, ac_dim) and std.shape == (B, ac_dim)
    assert jnp.allclose(mean, ref_mean, atol=1e-5, rtol=1e-5)
    assert jnp.allclose(std, ref_std, atol=1e-6, rtol=1e-6)

    print("KERNEL_OK")
</pallas_src>

<mosaic_0001>
module attributes {stable_mosaic.version = 11 : i64} {
  func.func @_policy_mlp_kernel(%arg0: i32, %arg1: memref<16x128xf32, #tpu.memory_space<vmem>>, %arg2: memref<128x128xf32, #tpu.memory_space<vmem>>, %arg3: memref<1x128xf32, #tpu.memory_space<vmem>>, %arg4: memref<128x128xf32, #tpu.memory_space<vmem>>, %arg5: memref<1x128xf32, #tpu.memory_space<vmem>>, %arg6: memref<128x128xf32, #tpu.memory_space<vmem>>, %arg7: memref<1x128xf32, #tpu.memory_space<vmem>>, %arg8: memref<16x128xf32, #tpu.memory_space<vmem>>) attributes {dimension_semantics = [#tpu.dimension_semantics<parallel>], iteration_bounds = array<i64: 1>, scalar_prefetch = 0 : i64, scratch_operands = 0 : i64, tpu.core_type = #tpu.core_type<tc>, window_params = [{transform_indices = @transform_0, window_bounds = array<i64: 16, 128>}, {pipeline_mode = #tpu.pipeline_mode<synchronous>, transform_indices = @transform_1, window_bounds = array<i64: 128, 128>}, {pipeline_mode = #tpu.pipeline_mode<synchronous>, transform_indices = @transform_2, window_bounds = array<i64: 1, 128>}, {pipeline_mode = #tpu.pipeline_mode<synchronous>, transform_indices = @transform_3, window_bounds = array<i64: 128, 128>}, {pipeline_mode = #tpu.pipeline_mode<synchronous>, transform_indices = @transform_4, window_bounds = array<i64: 1, 128>}, {pipeline_mode = #tpu.pipeline_mode<synchronous>, transform_indices = @transform_5, window_bounds = array<i64: 128, 128>}, {pipeline_mode = #tpu.pipeline_mode<synchronous>, transform_indices = @transform_6, window_bounds = array<i64: 1, 128>}, {transform_indices = @transform_7, window_bounds = array<i64: 16, 128>}]} {
    %c0 = arith.constant 0 : index
    %c0_0 = arith.constant 0 : index
    %0 = vector.load %arg1[%c0, %c0_0] : memref<16x128xf32, #tpu.memory_space<vmem>>, vector<16x128xf32>
    %c0_1 = arith.constant 0 : index
    %c0_2 = arith.constant 0 : index
    %1 = vector.load %arg2[%c0_1, %c0_2] : memref<128x128xf32, #tpu.memory_space<vmem>>, vector<128x128xf32>
    %cst = arith.constant dense<0.000000e+00> : vector<16x128xf32>
    %2 = tpu.matmul %0, %1, %cst {dimension_numbers = #tpu.dot_dimension_numbers<[1], [0], [0], [1], [0, 0, 1, 1], [], []>} : vector<16x128xf32>, vector<128x128xf32>, vector<16x128xf32> -> vector<16x128xf32>
    %c0_3 = arith.constant 0 : index
    %c0_4 = arith.constant 0 : index
    %3 = vector.load %arg3[%c0_3, %c0_4] : memref<1x128xf32, #tpu.memory_space<vmem>>, vector<1x128xf32>
    %4 = vector.broadcast %3 : vector<1x128xf32> to vector<16x128xf32>
    %5 = arith.addf %2, %4 : vector<16x128xf32>
    %6 = math.tanh %5 : vector<16x128xf32>
    %c0_5 = arith.constant 0 : index
    %c0_6 = arith.constant 0 : index
    %7 = vector.load %arg4[%c0_5, %c0_6] : memref<128x128xf32, #tpu.memory_space<vmem>>, vector<128x128xf32>
    %cst_7 = arith.constant dense<0.000000e+00> : vector<16x128xf32>
    %8 = tpu.matmul %6, %7, %cst_7 {dimension_numbers = #tpu.dot_dimension_numbers<[1], [0], [0], [1], [0, 0, 1, 1], [], []>} : vector<16x128xf32>, vector<128x128xf32>, vector<16x128xf32> -> vector<16x128xf32>
    %c0_8 = arith.constant 0 : index
    %c0_9 = arith.constant 0 : index
    %9 = vector.load %arg5[%c0_8, %c0_9] : memref<1x128xf32, #tpu.memory_space<vmem>>, vector<1x128xf32>
    %10 = vector.broadcast %9 : vector<1x128xf32> to vector<16x128xf32>
    %11 = arith.addf %8, %10 : vector<16x128xf32>
    %12 = math.tanh %11 : vector<16x128xf32>
    %c0_10 = arith.constant 0 : index
    %c0_11 = arith.constant 0 : index
    %13 = vector.load %arg6[%c0_10, %c0_11] : memref<128x128xf32, #tpu.memory_space<vmem>>, vector<128x128xf32>
    %cst_12 = arith.constant dense<0.000000e+00> : vector<16x128xf32>
    %14 = tpu.matmul %12, %13, %cst_12 {dimension_numbers = #tpu.dot_dimension_numbers<[1], [0], [0], [1], [0, 0, 1, 1], [], []>} : vector<16x128xf32>, vector<128x128xf32>, vector<16x128xf32> -> vector<16x128xf32>
    %c0_13 = arith.constant 0 : index
    %c0_14 = arith.constant 0 : index
    %15 = vector.load %arg7[%c0_13, %c0_14] : memref<1x128xf32, #tpu.memory_space<vmem>>, vector<1x128xf32>
    %16 = vector.broadcast %15 : vector<1x128xf32> to vector<16x128xf32>
    %17 = arith.addf %14, %16 : vector<16x128xf32>
    %c0_15 = arith.constant 0 : index
    %c0_16 = arith.constant 0 : index
    %18 = vector.load %arg8[%c0_15, %c0_16] : memref<16x128xf32, #tpu.memory_space<vmem>>, vector<16x128xf32>
    tpu.vector_store %arg8[%c0_15, %c0_16], %17 {strides = array<i32>} : memref<16x128xf32, #tpu.memory_space<vmem>>, vector<16x128xf32>,
    return
  }
  func.func @transform_0(%arg0: i32) -> (i32, i32) {
    %c0_i32 = arith.constant 0 : i32
    %c0_i32_0 = arith.constant 0 : i32
    return %arg0, %c0_i32 : i32, i32
  }
  func.func @transform_1(%arg0: i32) -> (i32, i32) {
    %c0_i32 = arith.constant 0 : i32
    %c0_i32_0 = arith.constant 0 : i32
    %c0_i32_1 = arith.constant 0 : i32
    return %c0_i32, %c0_i32_0 : i32, i32
  }
  func.func @transform_2(%arg0: i32) -> (i32, i32) {
    %c0_i32 = arith.constant 0 : i32
    %c0_i32_0 = arith.constant 0 : i32
    %c0_i32_1 = arith.constant 0 : i32
    return %c0_i32, %c0_i32_0 : i32, i32
  }
  func.func @transform_3(%arg0: i32) -> (i32, i32) {
    %c0_i32 = arith.constant 0 : i32
    %c0_i32_0 = arith.constant 0 : i32
    %c0_i32_1 = arith.constant 0 : i32
    return %c0_i32, %c0_i32_0 : i32, i32
  }
  func.func @transform_4(%arg0: i32) -> (i32, i32) {
    %c0_i32 = arith.constant 0 : i32
    %c0_i32_0 = arith.constant 0 : i32
    %c0_i32_1 = arith.constant 0 : i32
    return %c0_i32, %c0_i32_0 : i32, i32
  }
  func.func @transform_5(%arg0: i32) -> (i32, i32) {
    %c0_i32 = arith.constant 0 : i32
    %c0_i32_0 = arith.constant 0 : i32
    %c0_i32_1 = arith.constant 0 : i32
    return %c0_i32, %c0_i32_0 : i32, i32
  }
  func.func @transform_6(%arg0: i32) -> (i32, i32) {
    %c0_i32 = arith.constant 0 : i32
    %c0_i32_0 = arith.constant 0 : i32
    %c0_i32_1 = arith.constant 0 : i32
    return %c0_i32, %c0_i32_0 : i32, i32
  }
  func.func @transform_7(%arg0: i32) -> (i32, i32) {
    %c0_i32 = arith.constant 0 : i32
    %c0_i32_0 = arith.constant 0 : i32
    return %arg0, %c0_i32 : i32, i32
  }
}

</mosaic_0001>

<llo_original>
// kernel: trpo_forward.1
$region0: #{trpo_forward.1}
  #allocation0 [shape = 'u32[]', space=smem, size = 0x4, offset = 0x4, fixed_abs, tag = 'smem constant byte address 0x4 - core index']
  #allocation1 [shape = 'u32[144,128]{1,0:T(1,128)}', space=vmem, size = 0x12000, scoped, tag = 'internal scratch']
  %s0 = inlined_call_operand.hbm [shape: f32[16,128], index: 0, kind: input, shape index: {}]
  %s1 = inlined_call_operand.hbm [shape: f32[128,128], index: 1, kind: input, shape index: {}]
  %s2 = inlined_call_operand.hbm [shape: f32[1,128], index: 2, kind: input, shape index: {}]
  %s3 = inlined_call_operand.hbm [shape: f32[128,128], index: 3, kind: input, shape index: {}]
  %s4 = inlined_call_operand.hbm [shape: f32[1,128], index: 4, kind: input, shape index: {}]
  %s5 = inlined_call_operand.hbm [shape: f32[128,128], index: 5, kind: input, shape index: {}]
  %s6 = inlined_call_operand.hbm [shape: f32[1,128], index: 6, kind: input, shape index: {}]
  %s7 = inlined_call_operand.hbm [shape: f32[16,128], index: 7, kind: output, shape index: {}]
  %s8 = sld [smem:[#allocation0]]
  $region66: #{trpo_forward.1} parent=0
    _
  %s10 = ssub.s32 1, %s8
  %s11 = scalar_select 0, %s10, %s8
  $region1: #{trpo_forward.1} parent=0
    #allocation2 [shape = 'u8[8192]{0}', space=vmem, size = 0x2000, scoped, tag = 'input window, operand 0, single buffered']
    #allocation3 [shape = 's32[1]{0}', space=sflag, size = 0x4, scoped, tag = 'scoped memory for trpo_forward.1']
    #allocation4 [shape = 's32[1]{0}', space=sflag, size = 0x4, scoped, tag = 'scoped memory for trpo_forward.1']
    #allocation5 [shape = 'u8[65536]{0}', space=vmem, size = 0x10000, scoped, tag = 'input window, operand 1, single buffered']
    #allocation6 [shape = 's32[1]{0}', space=sflag, size = 0x4, scoped, tag = 'scoped memory for trpo_forward.1']
    #allocation7 [shape = 'u8[512]{0}', space=vmem, size = 0x400, scoped, tag = 'input window, operand 2, single buffered']
    #allocation8 [shape = 'u8[65536]{0}', space=vmem, size = 0x10000, scoped, tag = 'input window, operand 3, single buffered']
    #allocation9 [shape = 's32[1]{0}', space=sflag, size = 0x4, scoped, tag = 'scoped memory for trpo_forward.1']
    #allocation10 [shape = 'u8[512]{0}', space=vmem, size = 0x400, scoped, tag = 'input window, operand 4, single buffered']
    #allocation11 [shape = 'u8[65536]{0}', space=vmem, size = 0x10000, scoped, tag = 'input window, operand 5, single buffered']
    #allocation12 [shape = 's32[1]{0}', space=sflag, size = 0x4, scoped, tag = 'scoped memory for trpo_forward.1']
    #allocation13 [shape = 'u8[512]{0}', space=vmem, size = 0x400, scoped, tag = 'input window, operand 6, single buffered']
    #allocation14 [shape = 'u8[8192]{0}', space=vmem, size = 0x2000, scoped, tag = 'output window, operand 0, single buffered']
    %12 = vsyncpa [#allocation3], 0
    %13 = vsyncpa [#allocation6], 0
    %14 = vsyncpa [#allocation9], 0
    %15 = vsyncpa [#allocation12], 0
    %16 = vsyncpa [#allocation4], 0
    // Predicated region
    $region2: #{trpo_forward.1} parent=1 // pred_check
      _
    $region3: #{trpo_forward.1} parent=1 // pred_check_branch
      %18 = sbr.rel (0) target = $region5
    $region4: #{trpo_forward.1} parent=1 // pred_region
      %s20 = ssub.s32 256, 256
      %21 = vsyncadd [#allocation3], %s20
      %s22 = sshll.u32 [#allocation2], 4
      %s23 = int_to_ptr.vmem [resolvable:$true] %s22
      %28 = dma.hbm_to_vmem [thread:$0]  %s0, 256, %s23, [#allocation3], 128, 128, 8
    $region5: #{trpo_forward.1} parent=1 // pred_fallthru
      _
    // Predicated region
    $region6: #{trpo_forward.1} parent=1 // pred_check
      _
    $region7: #{trpo_forward.1} parent=1 // pred_check_branch
      %30 = sbr.rel (0) target = $region9
    $region8: #{trpo_forward.1} parent=1 // pred_region
      %s32 = ssub.s32 2048, 2048
      %33 = vsyncadd [#allocation6], %s32
      %s34 = sshll.u32 [#allocation5], 4
      %s35 = int_to_ptr.vmem [resolvable:$true] %s34
      %40 = dma.hbm_to_vmem [thread:$0]  %s1, 2048, %s35, [#allocation6], 128, 128, 8
    $region9: #{trpo_forward.1} parent=1 // pred_fallthru
      _
    // Predicated region
    $region10: #{trpo_forward.1} parent=1 // pred_check
      _
    $region11: #{trpo_forward.1} parent=1 // pred_check_branch
      %42 = sbr.rel (0) target = $region13
    $region12: #{trpo_forward.1} parent=1 // pred_region
      %s44 = ssub.s32 16, 16
      %45 = vsyncadd [#allocation6], %s44
      %s47 = sshll.u32 [#allocation7], 4
      %s48 = int_to_ptr.vmem [resolvable:$true] %s47
      %50 = dma.hbm_to_vmem [thread:$0]  %s2, 16, %s48, [#allocation6]
    $region13: #{trpo_forward.1} parent=1 // pred_fallthru
      _
    // Predicated region
    $region14: #{trpo_forward.1} parent=1 // pred_check
      _
    $region15: #{trpo_forward.1} parent=1 // pred_check_branch
      %52 = sbr.rel (0) target = $region17
    $region16: #{trpo_forward.1} parent=1 // pred_region
      %s54 = ssub.s32 2048, 2048
      %55 = vsyncadd [#allocation9], %s54
      %s56 = sshll.u32 [#allocation8], 4
      %s57 = int_to_ptr.vmem [resolvable:$true] %s56
      %62 = dma.hbm_to_vmem [thread:$0]  %s3, 2048, %s57, [#allocation9], 128, 128, 8
    $region17: #{trpo_forward.1} parent=1 // pred_fallthru
      _
    // Predicated region
    $region18: #{trpo_forward.1} parent=1 // pred_check
      _
    $region19: #{trpo_forward.1} parent=1 // pred_check_branch
      %64 = sbr.rel (0) target = $region21
    $region20: #{trpo_forward.1} parent=1 // pred_region
      %s66 = ssub.s32 16, 16
      %67 = vsyncadd [#allocation9], %s66
      %s69 = sshll.u32 [#allocation10], 4
      %s70 = int_to_ptr.vmem [resolvable:$true] %s69
      %72 = dma.hbm_to_vmem [thread:$0]  %s4, 16, %s70, [#allocation9]
    $region21: #{trpo_forward.1} parent=1 // pred_fallthru
      _
    // Predicated region
    $region22: #{trpo_forward.1} parent=1 // pred_check
      _
    $region23: #{trpo_forward.1} parent=1 // pred_check_branch
      %74 = sbr.rel (0) target = $region25
    $region24: #{trpo_forward.1} parent=1 // pred_region
      %s76 = ssub.s32 2048, 2048
      %77 = vsyncadd [#allocation12], %s76
      %s78 = sshll.u32 [#allocation11], 4
      %s79 = int_to_ptr.vmem [resolvable:$true] %s78
      %84 = dma.hbm_to_vmem [thread:$0]  %s5, 2048, %s79, [#allocation12], 128, 128, 8
    $region25: #{trpo_forward.1} parent=1 // pred_fallthru
      _
    // Predicated region
    $region26: #{trpo_forward.1} parent=1 // pred_check
      _
    $region27: #{trpo_forward.1} parent=1 // pred_check_branch
      %86 = sbr.rel (0) target = $region29
    $region28: #{trpo_forward.1} parent=1 // pred_region
      %s88 = ssub.s32 16, 16
      %89 = vsyncadd [#allocation12], %s88
      %s91 = sshll.u32 [#allocation13], 4
      %s92 = int_to_ptr.vmem [resolvable:$true] %s91
      %94 = dma.hbm_to_vmem [thread:$0]  %s6, 16, %s92, [#allocation12]
    $region29: #{trpo_forward.1} parent=1 // pred_fallthru
      _
    // Predicated region
    $region30: #{trpo_forward.1} parent=1 // pred_check
      _
    $region31: #{trpo_forward.1} parent=1 // pred_check_branch
      %96 = sbr.rel (0) target = $region33
    $region32: #{trpo_forward.1} parent=1 // pred_region
      %97 = dma.done [#allocation3], 256
    $region33: #{trpo_forward.1} parent=1 // pred_fallthru
      _
    // Predicated region
    $region34: #{trpo_forward.1} parent=1 // pred_check
      _
    $region35: #{trpo_forward.1} parent=1 // pred_check_branch
      %99 = sbr.rel (0) target = $region37
    $region36: #{trpo_forward.1} parent=1 // pred_region
      %100 = dma.done [#allocation6], 2048
    $region37: #{trpo_forward.1} parent=1 // pred_fallthru
      _
    // Predicated region
    $region38: #{trpo_forward.1} parent=1 // pred_check
      _
    $region39: #{trpo_forward.1} parent=1 // pred_check_branch
      %102 = sbr.rel (0) target = $region41
    $region40: #{trpo_forward.1} parent=1 // pred_region
      %103 = dma.done [#allocation6], 16
    $region41: #{trpo_forward.1} parent=1 // pred_fallthru
      _
    // Predicated region
    $region42: #{trpo_forward.1} parent=1 // pred_check
      _
    $region43: #{trpo_forward.1} parent=1 // pred_check_branch
      %105 = sbr.rel (0) target = $region45
    $region44: #{trpo_forward.1} parent=1 // pred_region
      %106 = dma.done [#allocation9], 2048
    $region45: #{trpo_forward.1} parent=1 // pred_fallthru
      _
    // Predicated region
    $region46: #{trpo_forward.1} parent=1 // pred_check
      _
    $region47: #{trpo_forward.1} parent=1 // pred_check_branch
      %108 = sbr.rel (0) target = $region49
    $region48: #{trpo_forward.1} parent=1 // pred_region
      %109 = dma.done [#allocation9], 16
    $region49: #{trpo_forward.1} parent=1 // pred_fallthru
      _
    // Predicated region
    $region50: #{trpo_forward.1} parent=1 // pred_check
      _
    $region51: #{trpo_forward.1} parent=1 // pred_check_branch
      %111 = sbr.rel (0) target = $region53
    $region52: #{trpo_forward.1} parent=1 // pred_region
      %112 = dma.done [#allocation12], 2048
    $region53: #{trpo_forward.1} parent=1 // pred_fallthru
      _
    // Predicated region
    $region54: #{trpo_forward.1} parent=1 // pred_check
      _
    $region55: #{trpo_forward.1} parent=1 // pred_check_branch
      %114 = sbr.rel (0) target = $region57
    $region56: #{trpo_forward.1} parent=1 // pred_region
      %115 = dma.done [#allocation12], 16
    $region57: #{trpo_forward.1} parent=1 // pred_fallthru
      _
    %v116 = vld [vmem:[#allocation2] sm:$0xff]
    %v117 = vld [vmem:[#allocation2 + $0x8] sm:$0xff]
    %v118 = vld [vmem:[#allocation5] sm:$0xff]
    %v119 = vld [vmem:[#allocation5 + $0x8] sm:$0xff]
    %v120 = vld [vmem:[#allocation5 + $0x10] sm:$0xff]
    %v121 = vld [vmem:[#allocation5 + $0x18] sm:$0xff]
    %v122 = vld [vmem:[#allocation5 + $0x20] sm:$0xff]
    %v123 = vld [vmem:[#allocation5 + $0x28] sm:$0xff]
    %v124 = vld [vmem:[#allocation5 + $0x30] sm:$0xff]
    %v125 = vld [vmem:[#allocation5 + $0x38] sm:$0xff]
    %v126 = vld [vmem:[#allocation5 + $0x40] sm:$0xff]
    %v127 = vld [vmem:[#allocation5 + $0x48] sm:$0xff]
    %v128 = vld [vmem:[#allocation5 + $0x50] sm:$0xff]
    %v129 = vld [vmem:[#allocation5 + $0x58] sm:$0xff]
    %v130 = vld [vmem:[#allocation5 + $0x60] sm:$0xff]
    %v131 = vld [vmem:[#allocation5 + $0x68] sm:$0xff]
    %v132 = vld [vmem:[#allocation5 + $0x70] sm:$0xff]
    %v133 = vld [vmem:[#allocation5 + $0x78] sm:$0xff]
    %v134 = vld [vmem:[#allocation7] sm:$0x1]
    %v136 = vlaneseq
    %v137 = vshrl.u32 %v136, 7
    %v138 = vsub.s32 0, %v137
    %v139 = vrot.slane %v134, %v138
    %141 = vmatprep.subr.mxu0 0.0
    %142 = vmatpush1.msra.mxu0 %v118
    %143 = vmatprep.subr.mxu0 0.0
    %144 = vmatpush1.msra.mxu0 %v119
    %145 = vmatprep.subr.mxu0 0.0
    %146 = vmatpush1.msra.mxu0 %v120
    %147 = vmatprep.subr.mxu0 0.0
    %148 = vmatpush1.msra.mxu0 %v121
    %149 = vmatprep.subr.mxu0 0.0
    %150 = vmatpush1.msra.mxu0 %v122
    %151 = vmatprep.subr.mxu0 0.0
    %152 = vmatpush1.msra.mxu0 %v123
    %153 = vmatprep.subr.mxu0 0.0
    %154 = vmatpush1.msra.mxu0 %v124
    %155 = vmatprep.subr.mxu0 0.0
    %156 = vmatpush1.msra.mxu0 %v125
    %157 = vmatprep.subr.mxu0 0.0
    %158 = vmatpush1.msra.mxu0 %v126
    %159 = vmatprep.subr.mxu0 0.0
    %160 = vmatpush1.msra.mxu0 %v127
    %161 = vmatprep.subr.mxu0 0.0
    %162 = vmatpush1.msra.mxu0 %v128
    %163 = vmatprep.subr.mxu0 0.0
    %164 = vmatpush1.msra.mxu0 %v129
    %165 = vmatprep.subr.mxu0 0.0
    %166 = vmatpush1.msra.mxu0 %v130
    %167 = vmatprep.subr.mxu0 0.0
    %168 = vmatpush1.msra.mxu0 %v131
    %169 = vmatprep.subr.mxu0 0.0
    %170 = vmatpush1.msra.mxu0 %v132
    %171 = vmatprep.subr.mxu0 0.0
    %172 = vmatpush1.msra.mxu0 %v133
    %173 = vmatprep.subr.mxu0 0.0
    %174 = vmatpush1.msra.mxu0 0.0
    %175 = vmatprep.subr.mxu0 0.0
    %176 = vmatpush1.msra.mxu0 0.0
    %177 = vmatprep.subr.mxu0 0.0
    %178 = vmatpush1.msra.mxu0 0.0
    %179 = vmatprep.subr.mxu0 0.0
    %180 = vmatpush1.msra.mxu0 0.0
    %181 = vmatprep.subr.mxu0 0.0
    %182 = vmatpush1.msra.mxu0 0.0
    %183 = vmatprep.subr.mxu0 0.0
    %184 = vmatpush1.msra.mxu0 0.0
    %185 = vmatprep.subr.mxu0 0.0
    %186 = vmatpush1.msra.mxu0 0.0
    %187 = vmatprep.subr.mxu0 0.0
    %188 = vmatpush1.msra.mxu0 0.0
    %189 = vmatprep.subr.mxu0 0.0
    %190 = vmatpush1.msra.mxu0 0.0
    %191 = vmatprep.subr.mxu0 0.0
    %192 = vmatpush1.msra.mxu0 0.0
    %193 = vmatprep.subr.mxu0 0.0
    %194 = vmatpush1.msra.mxu0 0.0
    %195 = vmatprep.subr.mxu0 0.0
    %196 = vmatpush1.msra.mxu0 0.0
    %197 = vmatprep.subr.mxu0 0.0
    %198 = vmatpush1.msra.mxu0 0.0
    %199 = vmatprep.subr.mxu0 0.0
    %200 = vmatpush1.msra.mxu0 0.0
    %201 = vmatprep.subr.mxu0 0.0
    %202 = vmatpush1.msra.mxu0 0.0
    %203 = vmatprep.subr.mxu0 0.0
    %204 = vmatpush1.msra.mxu0 0.0
    %205 = vmatprep.mubr.f32.mxu0 0.0
    %206 = vmatmul.mubr.f32.gmra.mrb[0].mxu0 %v116
    %v207 = vpop.f32.mrb[0].mxu0
    %v208 = vadd.f32 %v139, %v207
    %v209 = vpop.f32.mrb[0].mxu0
    %210 = vmatprep.mubr.f32.mxu0 0.0
    %211 = vmatmul.mubr.f32.gmra.mrb[0].mxu0 %v117
    %v212 = vpop.f32.mrb[0].mxu0
    %v213 = vadd.f32 %v139, %v212
    %v214 = vpop.f32.mrb[0].mxu0
    %215 = vdwg.mxu0
    %v216 = vtanh.pop %v208
    %v217 = vtanh.pop %v213
    %v218 = vld [vmem:[#allocation8] sm:$0xff]
    %v219 = vld [vmem:[#allocation8 + $0x8] sm:$0xff]
    %v220 = vld [vmem:[#allocation8 + $0x10] sm:$0xff]
    %v221 = vld [vmem:[#allocation8 + $0x18] sm:$0xff]
    %v222 = vld [vmem:[#allocation8 + $0x20] sm:$0xff]
    %v223 = vld [vmem:[#allocation8 + $0x28] sm:$0xff]
    %v224 = vld [vmem:[#allocation8 + $0x30] sm:$0xff]
    %v225 = vld [vmem:[#allocation8 + $0x38] sm:$0xff]
    %v226 = vld [vmem:[#allocation8 + $0x40] sm:$0xff]
    %v227 = vld [vmem:[#allocation8 + $0x48] sm:$0xff]
    %v228 = vld [vmem:[#allocation8 + $0x50] sm:$0xff]
    %v229 = vld [vmem:[#allocation8 + $0x58] sm:$0xff]
    %v230 = vld [vmem:[#allocation8 + $0x60] sm:$0xff]
    %v231 = vld [vmem:[#allocation8 + $0x68] sm:$0xff]
    %v232 = vld [vmem:[#allocation8 + $0x70] sm:$0xff]
    %v233 = vld [vmem:[#allocation8 + $0x78] sm:$0xff]
    %v234 = vld [vmem:[#allocation10] sm:$0x1]
    %v236 = vlaneseq
    %v237 = vshrl.u32 %v236, 7
    %v238 = vsub.s32 0, %v237
    %v239 = vrot.slane %v234, %v238
    %241 = vmatprep.subr.mxu0 0.0
    %242 = vmatpush1.msra.mxu0 %v218
    %243 = vmatprep.subr.mxu0 0.0
    %244 = vmatpush1.msra.mxu0 %v219
    %245 = vmatprep.subr.mxu0 0.0
    %246 = vmatpush1.msra.mxu0 %v220
    %247 = vmatprep.subr.mxu0 0.0
    %248 = vmatpush1.msra.mxu0 %v221
    %249 = vmatprep.subr.mxu0 0.0
    %250 = vmatpush1.msra.mxu0 %v222
    %251 = vmatprep.subr.mxu0 0.0
    %252 = vmatpush1.msra.mxu0 %v223
    %253 = vmatprep.subr.mxu0 0.0
    %254 = vmatpush1.msra.mxu0 %v224
    %255 = vmatprep.subr.mxu0 0.0
    %256 = vmatpush1.msra.mxu0 %v225
    %257 = vmatprep.subr.mxu0 0.0
    %258 = vmatpush1.msra.mxu0 %v226
    %259 = vmatprep.subr.mxu0 0.0
    %260 = vmatpush1.msra.mxu0 %v227
    %261 = vmatprep.subr.mxu0 0.0
    %262 = vmatpush1.msra.mxu0 %v228
    %263 = vmatprep.subr.mxu0 0.0
    %264 = vmatpush1.msra.mxu0 %v229
    %265 = vmatprep.subr.mxu0 0.0
    %266 = vmatpush1.msra.mxu0 %v230
    %267 = vmatprep.subr.mxu0 0.0
    %268 = vmatpush1.msra.mxu0 %v231
    %269 = vmatprep.subr.mxu0 0.0
    %270 = vmatpush1.msra.mxu0 %v232
    %271 = vmatprep.subr.mxu0 0.0
    %272 = vmatpush1.msra.mxu0 %v233
    %273 = vmatprep.subr.mxu0 0.0
    %274 = vmatpush1.msra.mxu0 0.0
    %275 = vmatprep.subr.mxu0 0.0
    %276 = vmatpush1.msra.mxu0 0.0
    %277 = vmatprep.subr.mxu0 0.0
    %278 = vmatpush1.msra.mxu0 0.0
    %279 = vmatprep.subr.mxu0 0.0
    %280 = vmatpush1.msra.mxu0 0.0
    %281 = vmatprep.subr.mxu0 0.0
    %282 = vmatpush1.msra.mxu0 0.0
    %283 = vmatprep.subr.mxu0 0.0
    %284 = vmatpush1.msra.mxu0 0.0
    %285 = vmatprep.subr.mxu0 0.0
    %286 = vmatpush1.msra.mxu0 0.0
    %287 = vmatprep.subr.mxu0 0.0
    %288 = vmatpush1.msra.mxu0 0.0
    %289 = vmatprep.subr.mxu0 0.0
    %290 = vmatpush1.msra.mxu0 0.0
    %291 = vmatprep.subr.mxu0 0.0
    %292 = vmatpush1.msra.mxu0 0.0
    %293 = vmatprep.subr.mxu0 0.0
    %294 = vmatpush1.msra.mxu0 0.0
    %295 = vmatprep.subr.mxu0 0.0
    %296 = vmatpush1.msra.mxu0 0.0
    %297 = vmatprep.subr.mxu0 0.0
    %298 = vmatpush1.msra.mxu0 0.0
    %299 = vmatprep.subr.mxu0 0.0
    %300 = vmatpush1.msra.mxu0 0.0
    %301 = vmatprep.subr.mxu0 0.0
    %302 = vmatpush1.msra.mxu0 0.0
    %303 = vmatprep.subr.mxu0 0.0
    %304 = vmatpush1.msra.mxu0 0.0
    %305 = vmatprep.mubr.f32.mxu0 0.0
    %306 = vmatmul.mubr.f32.gmra.mrb[0].mxu0 %v216
    %v307 = vpop.f32.mrb[0].mxu0
    %v308 = vadd.f32 %v239, %v307
    %v309 = vpop.f32.mrb[0].mxu0
    %310 = vmatprep.mubr.f32.mxu0 0.0
    %311 = vmatmul.mubr.f32.gmra.mrb[0].mxu0 %v217
    %v312 = vpop.f32.mrb[0].mxu0
    %v313 = vadd.f32 %v239, %v312
    %v314 = vpop.f32.mrb[0].mxu0
    %315 = vdwg.mxu0
    %v316 = vtanh.pop %v308
    %v317 = vtanh.pop %v313
    %v318 = vld [vmem:[#allocation11] sm:$0xff]
    %v319 = vld [vmem:[#allocation11 + $0x8] sm:$0xff]
    %v320 = vld [vmem:[#allocation11 + $0x10] sm:$0xff]
    %v321 = vld [vmem:[#allocation11 + $0x18] sm:$0xff]
    %v322 = vld [vmem:[#allocation11 + $0x20] sm:$0xff]
    %v323 = vld [vmem:[#allocation11 + $0x28] sm:$0xff]
    %v324 = vld [vmem:[#allocation11 + $0x30] sm:$0xff]
    %v325 = vld [vmem:[#allocation11 + $0x38] sm:$0xff]
    %v326 = vld [vmem:[#allocation11 + $0x40] sm:$0xff]
    %v327 = vld [vmem:[#allocation11 + $0x48] sm:$0xff]
    %v328 = vld [vmem:[#allocation11 + $0x50] sm:$0xff]
    %v329 = vld [vmem:[#allocation11 + $0x58] sm:$0xff]
    %v330 = vld [vmem:[#allocation11 + $0x60] sm:$0xff]
    %v331 = vld [vmem:[#allocation11 + $0x68] sm:$0xff]
    %v332 = vld [vmem:[#allocation11 + $0x70] sm:$0xff]
    %v333 = vld [vmem:[#allocation11 + $0x78] sm:$0xff]
    %v334 = vld [vmem:[#allocation13] sm:$0x1]
    %v336 = vlaneseq
    %v337 = vshrl.u32 %v336, 7
    %v338 = vsub.s32 0, %v337
    %v339 = vrot.slane %v334, %v338
    %341 = vmatprep.subr.mxu0 0.0
    %342 = vmatpush1.msra.mxu0 %v318
    %343 = vmatprep.subr.mxu0 0.0
    %344 = vmatpush1.msra.mxu0 %v319
    %345 = vmatprep.subr.mxu0 0.0
    %346 = vmatpush1.msra.mxu0 %v320
    %347 = vmatprep.subr.mxu0 0.0
    %348 = vmatpush1.msra.mxu0 %v321
    %349 = vmatprep.subr.mxu0 0.0
    %350 = vmatpush1.msra.mxu0 %v322
    %351 = vmatprep.subr.mxu0 0.0
    %352 = vmatpush1.msra.mxu0 %v323
    %353 = vmatprep.subr.mxu0 0.0
    %354 = vmatpush1.msra.mxu0 %v324
    %355 = vmatprep.subr.mxu0 0.0
    %356 = vmatpush1.msra.mxu0 %v325
    %357 = vmatprep.subr.mxu0 0.0
    %358 = vmatpush1.msra.mxu0 %v326
    %359 = vmatprep.subr.mxu0 0.0
    %360 = vmatpush1.msra.mxu0 %v327
    %361 = vmatprep.subr.mxu0 0.0
    %362 = vmatpush1.msra.mxu0 %v328
    %363 = vmatprep.subr.mxu0 0.0
    %364 = vmatpush1.msra.mxu0 %v329
    %365 = vmatprep.subr.mxu0 0.0
    %366 = vmatpush1.msra.mxu0 %v330
    %367 = vmatprep.subr.mxu0 0.0
    %368 = vmatpush1.msra.mxu0 %v331
    %369 = vmatprep.subr.mxu0 0.0
    %370 = vmatpush1.msra.mxu0 %v332
    %371 = vmatprep.subr.mxu0 0.0
    %372 = vmatpush1.msra.mxu0 %v333
    %373 = vmatprep.subr.mxu0 0.0
    %374 = vmatpush1.msra.mxu0 0.0
    %375 = vmatprep.subr.mxu0 0.0
    %376 = vmatpush1.msra.mxu0 0.0
    %377 = vmatprep.subr.mxu0 0.0
    %378 = vmatpush1.msra.mxu0 0.0
    %379 = vmatprep.subr.mxu0 0.0
    %380 = vmatpush1.msra.mxu0 0.0
    %381 = vmatprep.subr.mxu0 0.0
    %382 = vmatpush1.msra.mxu0 0.0
    %383 = vmatprep.subr.mxu0 0.0
    %384 = vmatpush1.msra.mxu0 0.0
    %385 = vmatprep.subr.mxu0 0.0
    %386 = vmatpush1.msra.mxu0 0.0
    %387 = vmatprep.subr.mxu0 0.0
    %388 = vmatpush1.msra.mxu0 0.0
    %389 = vmatprep.subr.mxu0 0.0
    %390 = vmatpush1.msra.mxu0 0.0
    %391 = vmatprep.subr.mxu0 0.0
    %392 = vmatpush1.msra.mxu0 0.0
    %393 = vmatprep.subr.mxu0 0.0
    %394 = vmatpush1.msra.mxu0 0.0
    %395 = vmatprep.subr.mxu0 0.0
    %396 = vmatpush1.msra.mxu0 0.0
    %397 = vmatprep.subr.mxu0 0.0
    %398 = vmatpush1.msra.mxu0 0.0
    %399 = vmatprep.subr.mxu0 0.0
    %400 = vmatpush1.msra.mxu0 0.0
    %401 = vmatprep.subr.mxu0 0.0
    %402 = vmatpush1.msra.mxu0 0.0
    %403 = vmatprep.subr.mxu0 0.0
    %404 = vmatpush1.msra.mxu0 0.0
    %405 = vmatprep.mubr.f32.mxu0 0.0
    %406 = vmatmul.mubr.f32.gmra.mrb[0].mxu0 %v316
    %v407 = vpop.f32.mrb[0].mxu0
    %v408 = vadd.f32 %v339, %v407
    %v409 = vpop.f32.mrb[0].mxu0
    %410 = vmatprep.mubr.f32.mxu0 0.0
    %411 = vmatmul.mubr.f32.gmra.mrb[0].mxu0 %v317
    %v412 = vpop.f32.mrb[0].mxu0
    %v413 = vadd.f32 %v339, %v412
    %v414 = vpop.f32.mrb[0].mxu0
    %415 = vdwg.mxu0
    %416 = vst [vmem:[#allocation14] sm:$0xff] %v408
    %417 = vst [vmem:[#allocation14 + $0x8] sm:$0xff] %v413
    // Predicated region
    $region58: #{trpo_forward.1} parent=1 // pred_check
      _
    $region59: #{trpo_forward.1} parent=1 // pred_check_branch
      %419 = sbr.rel (0) target = $region61
    $region60: #{trpo_forward.1} parent=1 // pred_region
      %s421 = ssub.s32 256, 256
      %422 = vsyncadd [#allocation4], %s421
      %s423 = sshll.u32 [#allocation14], 4
      %s424 = int_to_ptr.vmem [resolvable:$true] %s423
      %429 = dma.vmem_to_hbm [thread:$0]  %s424, 256, %s7, [#allocation4], 128, 128, 8
    $region61: #{trpo_forward.1} parent=1 // pred_fallthru
      _
    // Predicated region
    $region62: #{trpo_forward.1} parent=1 // pred_check
      _
    $region63: #{trpo_forward.1} parent=1 // pred_check_branch
      %431 = sbr.rel (0) target = $region65
    $region64: #{trpo_forward.1} parent=1 // pred_region
      %432 = dma.done [#allocation4], 256
    $region65: #{trpo_forward.1} parent=1 // pred_fallthru
      _
    %433 = vsyncpa [#allocation3], 1
    %434 = vsyncpa [#allocation6], 1
    %435 = vsyncpa [#allocation9], 1
    %436 = vsyncpa [#allocation12], 1
    %437 = vsyncpa [#allocation4], 1

</llo_original>
